<compile_context>
chip_gen: v6e
topology: v6e:2x2x1
jax: 0.10.0
libtpu: 0.0.40
codegen_flags: <defaults>
</compile_context>

<pallas_src>
import functools
import math
from typing import NamedTuple

import jax
import jax.numpy as jnp
import numpy as np
from jax.experimental import pallas as pl
from jax.experimental.pallas import tpu as pltpu


def _round_up(v, m):
    return (v + m - 1) // m * m


class SwiGLUMeta(NamedTuple):
    din: int     # original in_features
    h: int       # original hidden_features
    dout: int    # original out_features
    din_p: int   # padded in_features (x128)
    th: int      # hidden chunk size
    h_eff: int   # padded hidden (multiple of th)
    n_h: int     # number of hidden chunks
    dout_p: int  # padded out_features (x128)


# --------------------------------------------------------------------------
# Kernel: one (row tile, H chunk) grid step.
# --------------------------------------------------------------------------
def _swiglu_kernel(x_ref, w12_ref, b12_ref, w3_ref, b3_ref, o_ref, acc_ref, *,
                   gate_dtype):
    """x_ref (tm, Din_p) | w12_ref (Din_p, 2*th) [cols :th = W1 chunk, th: = W2]
       b12_ref (1, 2*th) f32 | w3_ref (th, Dout_p) | b3_ref (1, Dout_p) f32
       o_ref (tm, Dout_p) | acc_ref (tm, Dout_p) f32 scratch."""
    th = w3_ref.shape[0]
    k = pl.program_id(1)

    @pl.when(k == 0)
    def _():
        acc_ref[...] = jnp.zeros_like(acc_ref)

    # Fused first projection for this H chunk on the MXU, f32 accumulation.
    x12 = jnp.dot(x_ref[...], w12_ref[...], preferred_element_type=jnp.float32)
    x12 = x12 + b12_ref[...]
    x1 = x12[:, :th]                           # static, 128-aligned slices
    x2 = x12[:, th:]
    if jnp.dtype(gate_dtype) != jnp.dtype(jnp.float32):
        x1 = x1.astype(gate_dtype)
        x2 = x2.astype(gate_dtype)
    hidden = (x1 * jax.nn.sigmoid(x1)) * x2    # SiLU(x1) * x2

    acc_ref[...] += jnp.dot(hidden.astype(w3_ref.dtype), w3_ref[...],
                            preferred_element_type=jnp.float32)

    @pl.when(k == pl.num_programs(1) - 1)
    def _():
        o_ref[...] = (acc_ref[...] + b3_ref[...]).astype(o_ref.dtype)


# --------------------------------------------------------------------------
# One-time weight preprocessing (cache the result at parameter load time).
# --------------------------------------------------------------------------
def prepare_swiglu_params(w12, b12, w3, b3, *, compute_dtype=jnp.bfloat16):
    """w12: [2H, Din]; b12: [2H]; w3: [Dout, H]; b3: [Dout]."""
    two_h, din = w12.shape
    h = two_h // 2
    dout = w3.shape[0]

    din_p = _round_up(din, 128)
    h_p = _round_up(h, 128)
    th = h_p if h_p <= 1024 else 512           # hidden chunk size
    h_eff = _round_up(h_p, th)
    n_h = h_eff // th
    dout_p = _round_up(dout, 128)

    w1 = jnp.zeros((din_p, h_eff), compute_dtype).at[:din, :h].set(
        w12[:h, :].T.astype(compute_dtype))
    w2 = jnp.zeros((din_p, h_eff), compute_dtype).at[:din, :h].set(
        w12[h:, :].T.astype(compute_dtype))
    # Chunk-interleaved fused layout: chunk k occupies cols [2*k*th, 2*(k+1)*th),
    # first th cols = W1 chunk, next th cols = W2 chunk.
    w12_f = jnp.stack([w1.reshape(din_p, n_h, th),
                       w2.reshape(din_p, n_h, th)], axis=2).reshape(din_p, 2 * h_eff)

    b1 = jnp.zeros((h_eff,), jnp.float32).at[:h].set(b12[:h].astype(jnp.float32))
    b2 = jnp.zeros((h_eff,), jnp.float32).at[:h].set(b12[h:].astype(jnp.float32))
    b12_f = jnp.stack([b1.reshape(n_h, th),
                       b2.reshape(n_h, th)], axis=1).reshape(1, 2 * h_eff)

    w3_t = jnp.zeros((h_eff, dout_p), compute_dtype).at[:h, :dout].set(
        w3.T.astype(compute_dtype))
    b3_r = jnp.zeros((1, dout_p), jnp.float32).at[0, :dout].set(
        b3.astype(jnp.float32))

    meta = SwiGLUMeta(din, h, dout, din_p, th, h_eff, n_h, dout_p)
    return (w12_f, b12_f, w3_t, b3_r), meta


# --------------------------------------------------------------------------
# Forward from preprocessed weights.
# --------------------------------------------------------------------------
def _swiglu_forward(x, w12_f, b12_f, w3_t, b3_r, meta, *, tm, compute_dtype,
                    gate_dtype):
    orig_shape = x.shape
    out_dtype = x.dtype
    din, h, dout = meta.din, meta.h, meta.dout
    din_p, th, n_h, dout_p = meta.din_p, meta.th, meta.n_h, meta.dout_p

    x2d = x.reshape(-1, din)
    n = x2d.shape[0]

    # Row tile: bf16 packs 16 rows / vreg sublane-pair -> align 16; else 8.
    row_align = 16 if jnp.dtype(compute_dtype).itemsize == 2 else 8
    tm_req = max(row_align, _round_up(tm, row_align))
    # Cap so the row grid has >= 2 steps whenever possible (v7x megacore).
    tm_cap = max(row_align, _round_up(-(-n // 2), row_align))
    tm_eff = min(tm_req, tm_cap)
    n_p = _round_up(n, tm_eff)

    # Skip pad / cast copies when already aligned (static conditions under jit).
    if x2d.dtype != compute_dtype:
        x2d = x2d.astype(compute_dtype)
    if (n_p, din_p) != (n, din):
        x_p = jnp.zeros((n_p, din_p), compute_dtype).at[:n, :din].set(x2d)
    else:
        x_p = x2d

    # Shape-derived VMEM budget (blocks + scratch + f32 temporaries + margin).
    cbytes = jnp.dtype(compute_dtype).itemsize
    obytes = jnp.dtype(out_dtype).itemsize
    w_bufs = 1 if n_h == 1 else 2
    needed = (
        2 * tm_eff * din_p * cbytes                 # x tile, double-buffered
        + w_bufs * din_p * (2 * th) * cbytes        # fused W12 chunk
        + w_bufs * 8 * (2 * th) * 4                 # b12 chunk (sublane-padded)
        + w_bufs * th * dout_p * cbytes             # W3 chunk
        + 8 * dout_p * 4                            # b3
        + 2 * tm_eff * dout_p * obytes              # out tile, double-buffered
        + tm_eff * dout_p * 4                       # f32 accumulator scratch
        + tm_eff * (2 * th) * 4                     # x12 temporary
        + tm_eff * th * 4                           # hidden temporary
    )
    vmem_limit = int(min(max(needed * 5 // 4 + (8 << 20), 32 << 20), 128 << 20))

    flops = 2 * n * din * (2 * h) + 2 * n * h * dout
    bytes_accessed = (n * din * cbytes + n * dout * obytes
                      + (din_p * 2 * meta.h_eff + meta.h_eff * dout_p) * cbytes
                      + (2 * meta.h_eff + dout_p) * 4)

    def _spec(shape, idx, invariant):
        # Single-buffer grid-invariant operands; default (double) otherwise.
        if invariant:
            return pl.BlockSpec(shape, idx, pipeline_mode=pl.Buffered(1))
        return pl.BlockSpec(shape, idx)

    kernel = functools.partial(_swiglu_kernel, gate_dtype=gate_dtype)

    out2d = pl.pallas_call(
        kernel,
        out_shape=jax.ShapeDtypeStruct((n_p, dout_p), out_dtype),
        grid_spec=pltpu.PrefetchScalarGridSpec(
            num_scalar_prefetch=0,
            grid=(n_p // tm_eff, n_h),
            in_specs=[
                pl.BlockSpec((tm_eff, din_p), lambda i, k: (i, 0)),        # x rows
                _spec((din_p, 2 * th), lambda i, k: (0, k), n_h == 1),     # W12 chunk
                _spec((1, 2 * th), lambda i, k: (0, k), n_h == 1),         # b12 chunk
                _spec((th, dout_p), lambda i, k: (k, 0), n_h == 1),        # W3 chunk
                _spec((1, dout_p), lambda i, k: (0, 0), True),             # b3
            ],
            out_specs=pl.BlockSpec((tm_eff, dout_p), lambda i, k: (i, 0)),
            scratch_shapes=[pltpu.VMEM((tm_eff, dout_p), jnp.float32)],
        ),
        compiler_params=pltpu.CompilerParams(
            dimension_semantics=("parallel", "arbitrary"),
            vmem_limit_bytes=vmem_limit,
        ),
        cost_estimate=pl.CostEstimate(flops=flops,
                                      transcendentals=n * h,
                                      bytes_accessed=bytes_accessed),
    )(x_p, w12_f, b12_f, w3_t, b3_r)

    if (n_p, dout_p) != (n, dout):
        out2d = out2d[:n, :dout]
    return out2d.reshape(*orig_shape[:-1], dout)


@functools.partial(jax.jit,
                   static_argnames=("meta", "tm", "compute_dtype", "gate_dtype"))
def swiglu_ffn_prepared(x, w12_f, b12_f, w3_t, b3_r, *, meta, tm=512,
                        compute_dtype=jnp.bfloat16, gate_dtype=jnp.float32):
    """Lean forward: pass cached outputs of prepare_swiglu_params()."""
    return _swiglu_forward(x, w12_f, b12_f, w3_t, b3_r, meta, tm=tm,
                           compute_dtype=compute_dtype, gate_dtype=gate_dtype)


@functools.partial(jax.jit, static_argnames=("tm", "compute_dtype", "gate_dtype"))
def swiglu_ffn(x, w12, b12, w3, b3, *, tm=512, compute_dtype=jnp.bfloat16,
               gate_dtype=jnp.float32):
    """Convenience wrapper (re-derives padded weights each call; prefer the
    prepared API for repeated calls)."""
    prepared, meta = prepare_swiglu_params(w12, b12, w3, b3,
                                           compute_dtype=compute_dtype)
    return _swiglu_forward(x, *prepared, meta, tm=tm,
                           compute_dtype=compute_dtype, gate_dtype=gate_dtype)


# --------------------------------------------------------------------------
# Reference + test harness.
# --------------------------------------------------------------------------
def _xavier_uniform(key, shape):
    fan_out, fan_in = shape
    bound = math.sqrt(6.0 / (fan_in + fan_out))
    return jax.random.uniform(key, shape, jnp.float32, minval=-bound, maxval=bound)


def _make_params(key, in_features, hidden_features, out_features):
    kw12, kw3 = jax.random.split(key)
    w12 = _xavier_uniform(kw12, (2 * hidden_features, in_features))
    b12 = jnp.zeros((2 * hidden_features,), jnp.float32)
    w3 = _xavier_uniform(kw3, (out_features, hidden_features))
    b3 = jnp.zeros((out_features,), jnp.float32)
    return w12, b12, w3, b3


def _reference(x, w12, b12, w3, b3):
    x12 = jnp.einsum("...d,hd->...h", x, w12) + b12
    h = w12.shape[0] // 2
    x1, x2 = x12[..., :h], x12[..., h:]
    hidden = jax.nn.silu(x1) * x2
    return jnp.einsum("...h,oh->...o", hidden, w3) + b3


if __name__ == "__main__":
    key = jax.random.PRNGKey(0)
    k1, k2, k3, k4, k5, k6 = jax.random.split(key, 6)

    # --- test 1: module-sized shapes (batch=2, seq=8, 32/32/32) -------------
    batch, seq = 2, 8
    in_f, hid_f, out_f = 32, 32, 32
    x = jax.random.normal(k1, (batch, seq, in_f), jnp.float32)
    w12, b12, w3, b3 = _make_params(k2, in_f, hid_f, out_f)
    ref = jax.block_until_ready(_reference(x, w12, b12, w3, b3))

    # f32 matmul path: must match the fp32 reference tightly.
    out_f32 = jax.block_until_ready(
        swiglu_ffn(x, w12, b12, w3, b3, compute_dtype=jnp.float32))
    assert out_f32.shape == (batch, seq, out_f)
    np.testing.assert_allclose(np.asarray(out_f32), np.asarray(ref),
                               rtol=1e-5, atol=1e-5)

    # bf16 default path via the cached-weights API (weight prep hoisted out).
    prepared, meta = prepare_swiglu_params(w12, b12, w3, b3)
    prepared = jax.block_until_ready(prepared)
    out_bf16 = jax.block_until_ready(swiglu_ffn_prepared(x, *prepared, meta=meta))
    np.testing.assert_allclose(np.asarray(out_bf16), np.asarray(ref),
                               rtol=3e-2, atol=3e-2)

    # --- test 2: ragged / unaligned shapes (padding path, no asserts) -------
    x2 = jax.random.normal(k3, (3, 7, 48), jnp.float32)          # n=21 rows
    w12b, b12b, w3b, b3b = _make_params(k4, 48, 96, 40)
    ref2 = jax.block_until_ready(_reference(x2, w12b, b12b, w3b, b3b))
    out2 = jax.block_until_ready(
        swiglu_ffn(x2, w12b, b12b, w3b, b3b, compute_dtype=jnp.float32))
    assert out2.shape == (3, 7, 40)
    np.testing.assert_allclose(np.asarray(out2), np.asarray(ref2),
                               rtol=1e-5, atol=1e-5)

    # --- test 3: large hidden -> exercises the H-tiled accumulator path -----
    x3 = jax.random.normal(k5, (2, 5, 32), jnp.float32)          # n=10 rows
    w12c, b12c, w3c, b3c = _make_params(k6, 32, 1200, 64)        # H_p=1280 -> 3 chunks
    ref3 = jax.block_until_ready(_reference(x3, w12c, b12c, w3c, b3c))
    out3 = jax.block_until_ready(
        swiglu_ffn(x3, w12c, b12c, w3c, b3c, compute_dtype=jnp.float32))
    assert out3.shape == (2, 5, 64)
    np.testing.assert_allclose(np.asarray(out3), np.asarray(ref3),
                               rtol=1e-4, atol=1e-4)

    print("KERNEL_OK")
</pallas_src>

<mosaic_0001>
module attributes {stable_mosaic.version = 11 : i64} {
  func.func @_swiglu_kernel(%arg0: i32, %arg1: i32, %arg2: memref<8x128xf32, #tpu.memory_space<vmem>>, %arg3: memref<128x256xf32, #tpu.memory_space<vmem>>, %arg4: memref<1x256xf32, #tpu.memory_space<vmem>>, %arg5: memref<128x128xf32, #tpu.memory_space<vmem>>, %arg6: memref<1x128xf32, #tpu.memory_space<vmem>>, %arg7: memref<8x128xf32, #tpu.memory_space<vmem>>, %arg8: memref<8x128xf32, #tpu.memory_space<vmem>>) attributes {dimension_semantics = [#tpu.dimension_semantics<parallel>, #tpu.dimension_semantics<arbitrary>], iteration_bounds = array<i64: 2, 1>, scalar_prefetch = 0 : i64, scratch_operands = 1 : i64, tpu.core_type = #tpu.core_type<tc>, window_params = [{transform_indices = @transform_0, window_bounds = array<i64: 8, 128>}, {pipeline_mode = #tpu.pipeline_mode<synchronous>, transform_indices = @transform_1, window_bounds = array<i64: 128, 256>}, {pipeline_mode = #tpu.pipeline_mode<synchronous>, transform_indices = @transform_2, window_bounds = array<i64: 1, 256>}, {pipeline_mode = #tpu.pipeline_mode<synchronous>, transform_indices = @transform_3, window_bounds = array<i64: 128, 128>}, {pipeline_mode = #tpu.pipeline_mode<synchronous>, transform_indices = @transform_4, window_bounds = array<i64: 1, 128>}, {transform_indices = @transform_5, window_bounds = array<i64: 8, 128>}]} {
    %c0_i32 = arith.constant 0 : i32
    %0 = arith.cmpi eq, %arg1, %c0_i32 : i32
    %1 = arith.extui %0 : i1 to i32
    %c0_i32_0 = arith.constant 0 : i32
    %2 = arith.cmpi ne, %1, %c0_i32_0 : i32
    scf.if %2 {
      %cst_16 = arith.constant 0.000000e+00 : f32
      %26 = vector.broadcast %cst_16 : f32 to vector<8x128xf32>
      %c0_17 = arith.constant 0 : index
      %c0_18 = arith.constant 0 : index
      %27 = vector.load %arg8[%c0_17, %c0_18] : memref<8x128xf32, #tpu.memory_space<vmem>>, vector<8x128xf32>
      tpu.vector_store %arg8[%c0_17, %c0_18], %26 {strides = array<i32>} : memref<8x128xf32, #tpu.memory_space<vmem>>, vector<8x128xf32>,
    } else {
    }
    %c0 = arith.constant 0 : index
    %c0_1 = arith.constant 0 : index
    %3 = vector.load %arg2[%c0, %c0_1] : memref<8x128xf32, #tpu.memory_space<vmem>>, vector<8x128xf32>
    %c0_2 = arith.constant 0 : index
    %c0_3 = arith.constant 0 : index
    %4 = vector.load %arg3[%c0_2, %c0_3] : memref<128x256xf32, #tpu.memory_space<vmem>>, vector<128x256xf32>
    %cst = arith.constant dense<0.000000e+00> : vector<8x256xf32>
    %5 = tpu.matmul %3, %4, %cst {dimension_numbers = #tpu.dot_dimension_numbers<[1], [0], [0], [1], [0, 0, 1, 1], [], []>} : vector<8x128xf32>, vector<128x256xf32>, vector<8x256xf32> -> vector<8x256xf32>
    %c0_4 = arith.constant 0 : index
    %c0_5 = arith.constant 0 : index
    %6 = vector.load %arg4[%c0_4, %c0_5] : memref<1x256xf32, #tpu.memory_space<vmem>>, vector<1x256xf32>
    %7 = vector.broadcast %6 : vector<1x256xf32> to vector<8x256xf32>
    %8 = arith.addf %5, %7 : vector<8x256xf32>
    %9 = vector.extract_strided_slice %8 {offsets = [0, 0], sizes = [8, 128], strides = [1, 1]} : vector<8x256xf32> to vector<8x128xf32>
    %10 = vector.extract_strided_slice %8 {offsets = [0, 128], sizes = [8, 128], strides = [1, 1]} : vector<8x256xf32> to vector<8x128xf32>
    %11 = arith.negf %9 : vector<8x128xf32>
    %12 = math.exp %11 : vector<8x128xf32>
    %cst_6 = arith.constant 1.000000e+00 : f32
    %13 = vector.broadcast %cst_6 : f32 to vector<8x128xf32>
    %14 = arith.addf %13, %12 : vector<8x128xf32>
    %15 = arith.divf %13, %14 : vector<8x128xf32>
    %16 = arith.mulf %9, %15 : vector<8x128xf32>
    %17 = arith.mulf %16, %10 : vector<8x128xf32>
    %c0_7 = arith.constant 0 : index
    %c0_8 = arith.constant 0 : index
    %18 = vector.load %arg8[%c0_7, %c0_8] : memref<8x128xf32, #tpu.memory_space<vmem>>, vector<8x128xf32>
    %c0_9 = arith.constant 0 : index
    %c0_10 = arith.constant 0 : index
    %19 = vector.load %arg5[%c0_9, %c0_10] : memref<128x128xf32, #tpu.memory_space<vmem>>, vector<128x128xf32>
    %cst_11 = arith.constant dense<0.000000e+00> : vector<8x128xf32>
    %20 = tpu.matmul %17, %19, %cst_11 {dimension_numbers = #tpu.dot_dimension_numbers<[1], [0], [0], [1], [0, 0, 1, 1], [], []>} : vector<8x128xf32>, vector<128x128xf32>, vector<8x128xf32> -> vector<8x128xf32>
    %21 = arith.addf %18, %20 : vector<8x128xf32>
    %c0_12 = arith.constant 0 : index
    %c0_13 = arith.constant 0 : index
    %22 = vector.load %arg8[%c0_12, %c0_13] : memref<8x128xf32, #tpu.memory_space<vmem>>, vector<8x128xf32>
    tpu.vector_store %arg8[%c0_12, %c0_13], %21 {strides = array<i32>} : memref<8x128xf32, #tpu.memory_space<vmem>>, vector<8x128xf32>,
    %c0_i32_14 = arith.constant 0 : i32
    %23 = arith.cmpi eq, %arg1, %c0_i32_14 : i32
    %24 = arith.extui %23 : i1 to i32
    %c0_i32_15 = arith.constant 0 : i32
    %25 = arith.cmpi ne, %24, %c0_i32_15 : i32
    scf.if %25 {
      %c0_16 = arith.constant 0 : index
      %c0_17 = arith.constant 0 : index
      %26 = vector.load %arg8[%c0_16, %c0_17] : memref<8x128xf32, #tpu.memory_space<vmem>>, vector<8x128xf32>
      %c0_18 = arith.constant 0 : index
      %c0_19 = arith.constant 0 : index
      %27 = vector.load %arg6[%c0_18, %c0_19] : memref<1x128xf32, #tpu.memory_space<vmem>>, vector<1x128xf32>
      %28 = vector.broadcast %27 : vector<1x128xf32> to vector<8x128xf32>
      %29 = arith.addf %26, %28 : vector<8x128xf32>
      %c0_20 = arith.constant 0 : index
      %c0_21 = arith.constant 0 : index
      %30 = vector.load %arg7[%c0_20, %c0_21] : memref<8x128xf32, #tpu.memory_space<vmem>>, vector<8x128xf32>
      tpu.vector_store %arg7[%c0_20, %c0_21], %29 {strides = array<i32>} : memref<8x128xf32, #tpu.memory_space<vmem>>, vector<8x128xf32>,
    } else {
    }
    return
  }
  func.func @transform_0(%arg0: i32, %arg1: i32) -> (i32, i32) {
    %c0_i32 = arith.constant 0 : i32
    %c0_i32_0 = arith.constant 0 : i32
    return %arg0, %c0_i32 : i32, i32
  }
  func.func @transform_1(%arg0: i32, %arg1: i32) -> (i32, i32) {
    %c0_i32 = arith.constant 0 : i32
    %c0_i32_0 = arith.constant 0 : i32
    return %c0_i32, %arg1 : i32, i32
  }
  func.func @transform_2(%arg0: i32, %arg1: i32) -> (i32, i32) {
    %c0_i32 = arith.constant 0 : i32
    %c0_i32_0 = arith.constant 0 : i32
    return %c0_i32, %arg1 : i32, i32
  }
  func.func @transform_3(%arg0: i32, %arg1: i32) -> (i32, i32) {
    %c0_i32 = arith.constant 0 : i32
    %c0_i32_0 = arith.constant 0 : i32
    return %arg1, %c0_i32 : i32, i32
  }
  func.func @transform_4(%arg0: i32, %arg1: i32) -> (i32, i32) {
    %c0_i32 = arith.constant 0 : i32
    %c0_i32_0 = arith.constant 0 : i32
    %c0_i32_1 = arith.constant 0 : i32
    return %c0_i32, %c0_i32_0 : i32, i32
  }
  func.func @transform_5(%arg0: i32, %arg1: i32) -> (i32, i32) {
    %c0_i32 = arith.constant 0 : i32
    %c0_i32_0 = arith.constant 0 : i32
    return %arg0, %c0_i32 : i32, i32
  }
}

</mosaic_0001>

<llo_original>
// kernel: swiglu_ffn.1
$region0: #{swiglu_ffn.1}
  #allocation0 [shape = 'u32[]', space=smem, size = 0x4, offset = 0x4, fixed_abs, tag = 'smem constant byte address 0x4 - core index']
  #allocation1 [shape = 'u32[144,128]{1,0:T(1,128)}', space=vmem, size = 0x12000, scoped, tag = 'internal scratch']
  #allocation2 [shape = 'f32[8,128]{1,0:T(8,128)}', space=vmem, size = 0x1000, scoped, tag = 'scratch operand']
  %s0 = inlined_call_operand.vmem [shape: f32[16,128], index: 0, kind: input, shape index: {}]
  %s1 = inlined_call_operand.vmem [shape: f32[128,256], index: 1, kind: input, shape index: {}]
  %s2 = inlined_call_operand.vmem [shape: f32[1,256], index: 2, kind: input, shape index: {}]
  %s3 = inlined_call_operand.vmem [shape: f32[128,128], index: 3, kind: input, shape index: {}]
  %s4 = inlined_call_operand.vmem [shape: f32[1,128], index: 4, kind: input, shape index: {}]
  %s5 = inlined_call_operand.vmem [shape: f32[16,128], index: 5, kind: output, shape index: {}]
  %s6 = sld [smem:[#allocation0]]
  $region61: #{swiglu_ffn.1} parent=0
    _
  %s8 = ssub.s32 1, %s6
  %s9 = scalar_select 0, %s8, %s6
  loop: start=0, step=1, limit=4
  $region2: #{swiglu_ffn.1} parent=0 // loop_pre_header
    _
  $region3: #{swiglu_ffn.1} parent=0 // loop_header
    %s11 = sphi 0, %s15
    %p12 = scmp.ge.s32.totalorder %s11, 4
    %s18 = sphi 0, %s30
    %s19 = sphi 0, %s26
    %s20 = sphi 0, %s18
    %s21 = sphi 0, %s19
    %s22 = sphi 0, %s20
    %s23 = sphi 0, %s21
    %s33 = sphi 0, %s35
    %s36 = sphi 0, %s33
    %s37 = sphi 0, %s36
    %s53 = sphi 0, %s37
    %s59 = sphi 0, %s61
    %s62 = sphi 0, %s59
    %s63 = sphi 0, %s62
    %s79 = sphi 0, %s63
    %s85 = sphi 0, %s87
    %s88 = sphi 0, %s85
    %s89 = sphi 0, %s88
    %s105 = sphi 0, %s89
    %s111 = sphi 0, %s113
    %s114 = sphi 0, %s111
    %s115 = sphi 0, %s114
    %s131 = sphi 0, %s115
    %s135 = sphi 0, %s135
    %s137 = sphi 0, %s135
    %s138 = sphi 0, %s137
    %s152 = sphi 0, %s138
    %s158 = sphi 0, %s160
    %s161 = sphi 0, %s158
    %s162 = sphi 0, %s161
    %s178 = sphi 0, %s162
  $region4: #{swiglu_ffn.1} parent=0 // loop_header_branch
    %14 = sbr.rel (%p12) target = $region8
  $region5: #{swiglu_ffn.1} parent=0 // loop_body
    %s16 = ssub.s32 %s11, 1
    %s17 = ssub.s32 %s11, 2
    %s24 = sadd.s32 1, %s19
    %p25 = scmp.ge.s32.totalorder %s24, 1
    %s26 = scalar_select %p25, 0, %s24
    %s27 = sadd.s32 1, %s18
    %s28 = scalar_select %p25, %s27, %s18
    %p29 = scmp.ge.s32.totalorder %s28, 2
    %s30 = scalar_select %p29, 0, %s28
    %s31 = ssub.s32 %s18, %s30
    %p32 = scmp.eq.s32.totalorder %s31, 0
    %s34 = sadd.s32 %s33, 1
    %s35 = scalar_select %p32, %s33, %s34
    %p38 = pneg %p32
    %p39 = scmp.eq.s32.totalorder %s11, 1
    %p40 = por %p38, %p39
    %p41 = scmp.ne.s32.totalorder %s33, %s36
    %p42 = scmp.eq.s32.totalorder %s11, 0
    %p43 = por %p41, %p42
    %p44 = scmp.ne.s32.totalorder %s33, %s36
    %p45 = scmp.eq.s32.totalorder %s16, 1
    %p46 = por %p44, %p45
    %p47 = scmp.ne.s32.totalorder %s36, %s37
    %p48 = scmp.eq.s32.totalorder %s16, 0
    %p49 = por %p47, %p48
    %p50 = scmp.ne.s32.totalorder %s36, %s37
    %p51 = scmp.eq.s32.totalorder %s17, 1
    %p52 = por %p50, %p51
    %p54 = scmp.ne.s32.totalorder %s37, %s53
    %p55 = scmp.eq.s32.totalorder %s17, 0
    %p56 = por %p54, %p55
    %s57 = ssub.s32 %s19, %s26
    %p58 = scmp.eq.s32.totalorder %s57, 0
    %s60 = sadd.s32 %s59, 1
    %s61 = scalar_select %p58, %s59, %s60
    %p64 = pneg %p58
    %p65 = scmp.eq.s32.totalorder %s11, 1
    %p66 = por %p64, %p65
    %p67 = scmp.ne.s32.totalorder %s59, %s62
    %p68 = scmp.eq.s32.totalorder %s11, 0
    %p69 = por %p67, %p68
    %p70 = scmp.ne.s32.totalorder %s59, %s62
    %p71 = scmp.eq.s32.totalorder %s16, 1
    %p72 = por %p70, %p71
    %p73 = scmp.ne.s32.totalorder %s62, %s63
    %p74 = scmp.eq.s32.totalorder %s16, 0
    %p75 = por %p73, %p74
    %p76 = scmp.ne.s32.totalorder %s62, %s63
    %p77 = scmp.eq.s32.totalorder %s17, 1
    %p78 = por %p76, %p77
    %p80 = scmp.ne.s32.totalorder %s63, %s79
    %p81 = scmp.eq.s32.totalorder %s17, 0
    %p82 = por %p80, %p81
    %s83 = ssub.s32 %s19, %s26
    %p84 = scmp.eq.s32.totalorder %s83, 0
    %s86 = sadd.s32 %s85, 1
    %s87 = scalar_select %p84, %s85, %s86
    %p90 = pneg %p84
    %p91 = scmp.eq.s32.totalorder %s11, 1
    %p92 = por %p90, %p91
    %p93 = scmp.ne.s32.totalorder %s85, %s88
    %p94 = scmp.eq.s32.totalorder %s11, 0
    %p95 = por %p93, %p94
    %p96 = scmp.ne.s32.totalorder %s85, %s88
    %p97 = scmp.eq.s32.totalorder %s16, 1
    %p98 = por %p96, %p97
    %p99 = scmp.ne.s32.totalorder %s88, %s89
    %p100 = scmp.eq.s32.totalorder %s16, 0
    %p101 = por %p99, %p100
    %p102 = scmp.ne.s32.totalorder %s88, %s89
    %p103 = scmp.eq.s32.totalorder %s17, 1
    %p104 = por %p102, %p103
    %p106 = scmp.ne.s32.totalorder %s89, %s105
    %p107 = scmp.eq.s32.totalorder %s17, 0
    %p108 = por %p106, %p107
    %s109 = ssub.s32 %s19, %s26
    %p110 = scmp.eq.s32.totalorder %s109, 0
    %s112 = sadd.s32 %s111, 1
    %s113 = scalar_select %p110, %s111, %s112
    %p116 = pneg %p110
    %p117 = scmp.eq.s32.totalorder %s11, 1
    %p118 = por %p116, %p117
    %p119 = scmp.ne.s32.totalorder %s111, %s114
    %p120 = scmp.eq.s32.totalorder %s11, 0
    %p121 = por %p119, %p120
    %p122 = scmp.ne.s32.totalorder %s111, %s114
    %p123 = scmp.eq.s32.totalorder %s16, 1
    %p124 = por %p122, %p123
    %p125 = scmp.ne.s32.totalorder %s114, %s115
    %p126 = scmp.eq.s32.totalorder %s16, 0
    %p127 = por %p125, %p126
    %p128 = scmp.ne.s32.totalorder %s114, %s115
    %p129 = scmp.eq.s32.totalorder %s17, 1
    %p130 = por %p128, %p129
    %p132 = scmp.ne.s32.totalorder %s115, %s131
    %p133 = scmp.eq.s32.totalorder %s17, 0
    %p134 = por %p132, %p133
    %s136 = sadd.s32 %s135, 1
    %p139 = scmp.eq.s32.totalorder %s11, 1
    %p140 = scmp.ne.s32.totalorder %s135, %s137
    %p141 = scmp.eq.s32.totalorder %s11, 0
    %p142 = por %p140, %p141
    %p143 = scmp.ne.s32.totalorder %s135, %s137
    %p144 = scmp.eq.s32.totalorder %s16, 1
    %p145 = por %p143, %p144
    %p146 = scmp.ne.s32.totalorder %s137, %s138
    %p147 = scmp.eq.s32.totalorder %s16, 0
    %p148 = por %p146, %p147
    %p149 = scmp.ne.s32.totalorder %s137, %s138
    %p150 = scmp.eq.s32.totalorder %s17, 1
    %p151 = por %p149, %p150
    %p153 = scmp.ne.s32.totalorder %s138, %s152
    %p154 = scmp.eq.s32.totalorder %s17, 0
    %p155 = por %p153, %p154
    %s156 = ssub.s32 %s18, %s30
    %p157 = scmp.eq.s32.totalorder %s156, 0
    %s159 = sadd.s32 %s158, 1
    %s160 = scalar_select %p157, %s158, %s159
    %p163 = pneg %p157
    %p164 = scmp.eq.s32.totalorder %s11, 1
    %p165 = por %p163, %p164
    %p166 = scmp.ne.s32.totalorder %s158, %s161
    %p167 = scmp.eq.s32.totalorder %s11, 0
    %p168 = por %p166, %p167
    %p169 = scmp.ne.s32.totalorder %s158, %s161
    %p170 = scmp.eq.s32.totalorder %s16, 1
    %p171 = por %p169, %p170
    %p172 = scmp.ne.s32.totalorder %s161, %s162
    %p173 = scmp.eq.s32.totalorder %s16, 0
    %p174 = por %p172, %p173
    %p175 = scmp.ne.s32.totalorder %s161, %s162
    %p176 = scmp.eq.s32.totalorder %s17, 1
    %p177 = por %p175, %p176
    %p179 = scmp.ne.s32.totalorder %s162, %s178
    %p180 = scmp.eq.s32.totalorder %s17, 0
    %p181 = por %p179, %p180
    %p182 = scmp.le.s32.totalorder 1, %s11
    %p183 = scmp.lt.s32.totalorder %s11, 3
    %p184 = pnand %p182, %p183
    %p185 = pneg %p184
    // Predicated region
    $region9: #{swiglu_ffn.1} parent=5 // pred_check
      _
    $region10: #{swiglu_ffn.1} parent=5 // pred_check_branch
      %187 = sbr.rel (%p184) target = $region12
    $region11: #{swiglu_ffn.1} parent=5 // pred_region
      %s188 = ssub.s32 %s11, 1
      // Predicated region
      $region13: #{swiglu_ffn.1} parent=11 // pred_check
        %p189 = pneg %p75
      $region14: #{swiglu_ffn.1} parent=11 // pred_check_branch
        %191 = sbr.rel (%p189) target = $region16
      $region15: #{swiglu_ffn.1} parent=11 // pred_region
        %s192 = smul.u32 2, %s21
        %p193 = scmp.lt.s32.totalorder %s192, 1
        %s194 = scalar_select %p193, %s192, 1
        %s195 = smul.addr %s194, 8
        %s196 = scalar_lea.vmem %s1, %s195
        %s197 = smul.u32 2, %s21
      $region16: #{swiglu_ffn.1} parent=11 // pred_fallthru
        _
      // Predicated region
      $region17: #{swiglu_ffn.1} parent=11 // pred_check
        %p198 = pneg %p101
      $region18: #{swiglu_ffn.1} parent=11 // pred_check_branch
        %200 = sbr.rel (%p198) target = $region20
      $region19: #{swiglu_ffn.1} parent=11 // pred_region
        %s201 = smul.u32 2, %s21
        %p202 = scmp.lt.s32.totalorder %s201, 1
        %s203 = scalar_select %p202, %s201, 1
        %s204 = scalar_lea.vmem %s2, %s203
        %s205 = smul.u32 2, %s21
      $region20: #{swiglu_ffn.1} parent=11 // pred_fallthru
        _
      // Predicated region
      $region21: #{swiglu_ffn.1} parent=11 // pred_check
        %p206 = pneg %p127
      $region22: #{swiglu_ffn.1} parent=11 // pred_check_branch
        %208 = sbr.rel (%p206) target = $region24
      $region23: #{swiglu_ffn.1} parent=11 // pred_region
        %s209 = smul.u32 16, %s21
        %p210 = scmp.lt.s32.totalorder %s209, 15
        %s211 = scalar_select %p210, %s209, 15
        %s212 = smul.addr %s211, 8
        %s213 = scalar_lea.vmem %s3, %s212
        %s214 = smul.u32 16, %s21
      $region24: #{swiglu_ffn.1} parent=11 // pred_fallthru
        _
      // Predicated region
      $region25: #{swiglu_ffn.1} parent=11 // pred_check
        %p215 = pneg %p148
      $region26: #{swiglu_ffn.1} parent=11 // pred_check_branch
        %217 = sbr.rel (%p215) target = $region28
      $region27: #{swiglu_ffn.1} parent=11 // pred_region
        _
      $region28: #{swiglu_ffn.1} parent=11 // pred_fallthru
        _
    $region12: #{swiglu_ffn.1} parent=5 // pred_fallthru
      _
    %p218 = scmp.lt.s32.totalorder %s11, 2
    // Predicated region
    $region29: #{swiglu_ffn.1} parent=5 // pred_check
      %p219 = pneg %p218
    $region30: #{swiglu_ffn.1} parent=5 // pred_check_branch
      %221 = sbr.rel (%p219) target = $region32
    $region31: #{swiglu_ffn.1} parent=5 // pred_region
      // Predicated region
      $region33: #{swiglu_ffn.1} parent=31 // pred_check
        %p222 = pneg %p43
      $region34: #{swiglu_ffn.1} parent=31 // pred_check_branch
        %224 = sbr.rel (%p222) target = $region36
      $region35: #{swiglu_ffn.1} parent=31 // pred_region
        %p225 = scmp.lt.s32.totalorder %s18, 1
        %s226 = scalar_select %p225, %s18, 1
        %s227 = smul.addr %s226, 8
        %s228 = scalar_lea.vmem %s0, %s227
      $region36: #{swiglu_ffn.1} parent=31 // pred_fallthru
        _
    $region32: #{swiglu_ffn.1} parent=5 // pred_fallthru
      _
    %p229 = scmp.le.s32.totalorder 1, %s11
    %p230 = scmp.lt.s32.totalorder %s11, 3
    %p231 = pnand %p229, %p230
    %p232 = pneg %p231
    // Predicated region
    $region37: #{swiglu_ffn.1} parent=5 // pred_check
      _
    $region38: #{swiglu_ffn.1} parent=5 // pred_check_branch
      %234 = sbr.rel (%p231) target = $region40
    $region39: #{swiglu_ffn.1} parent=5 // pred_region
      %s235 = ssub.s32 %s11, 1
      %p236 = scmp.lt.s32.totalorder %s20, 1
      %s237 = scalar_select %p236, %s20, 1
      %s238 = smul.addr %s237, 8
      %s239 = scalar_lea.vmem %s0, %s238
      %p240 = pneg %p49
      %p241 = pneg %p46
      %s242 = smul.u32 2, %s21
      %p243 = scmp.lt.s32.totalorder %s242, 1
      %s244 = scalar_select %p243, %s242, 1
      %s245 = smul.addr %s244, 8
      %s246 = scalar_lea.vmem %s1, %s245
      %p247 = pneg %p75
      %p248 = pneg %p72
      %s249 = smul.u32 2, %s21
      %p250 = scmp.lt.s32.totalorder %s249, 1
      %s251 = scalar_select %p250, %s249, 1
      %s252 = scalar_lea.vmem %s2, %s251
      %p253 = pneg %p101
      %p254 = pneg %p98
      %s255 = smul.u32 16, %s21
      %p256 = scmp.lt.s32.totalorder %s255, 15
      %s257 = scalar_select %p256, %s255, 15
      %s258 = smul.addr %s257, 8
      %s259 = scalar_lea.vmem %s3, %s258
      %p260 = pneg %p127
      %p261 = pneg %p124
      %p262 = pneg %p148
      %p263 = pneg %p145
      %p264 = pneg %p174
      %p265 = pneg %p171
      %p266 = scmp.lt.s32.totalorder %s20, 1
      %s267 = scalar_select %p266, %s20, 1
      %s268 = smul.addr %s267, 8
      %s269 = scalar_lea.vmem %s5, %s268
      %p270 = scmp.lt.s32.totalorder %s20, 1
      %s271 = scalar_select %p270, %s20, 1
      %s272 = smul.addr %s271, 8
      %s273 = scalar_lea.vmem %s0, %s272
      %s274 = smul.u32 2, %s21
      %p275 = scmp.lt.s32.totalorder %s274, 1
      %s276 = scalar_select %p275, %s274, 1
      %s277 = smul.addr %s276, 8
      %s278 = scalar_lea.vmem %s1, %s277
      %s279 = smul.u32 2, %s21
      %s280 = smul.u32 2, %s21
      %p281 = scmp.lt.s32.totalorder %s280, 1
      %s282 = scalar_select %p281, %s280, 1
      %s283 = scalar_lea.vmem %s2, %s282
      %s284 = smul.u32 2, %s21
      %s285 = smul.u32 16, %s21
      %p286 = scmp.lt.s32.totalorder %s285, 15
      %s287 = scalar_select %p286, %s285, 15
      %s288 = smul.addr %s287, 8
      %s289 = scalar_lea.vmem %s3, %s288
      %s290 = smul.u32 16, %s21
      %p291 = scmp.lt.s32.totalorder %s20, 1
      %s292 = scalar_select %p291, %s20, 1
      %s293 = smul.addr %s292, 8
      %s294 = scalar_lea.vmem %s5, %s293
      %p295 = scmp.eq.s32.totalorder %s21, 0
      // Predicated region
      $region41: #{swiglu_ffn.1} parent=39 // pred_check
        %p296 = pneg %p295
      $region42: #{swiglu_ffn.1} parent=39 // pred_check_branch
        %298 = sbr.rel (%p296) target = $region44
      $region43: #{swiglu_ffn.1} parent=39 // pred_region
        %299 = vst [vmem:[#allocation2] sm:$0xff] 0.0
      $region44: #{swiglu_ffn.1} parent=39 // pred_fallthru
        _
      %v300 = vld [vmem:[%s273] sm:$0xff]
      %v301 = vld [vmem:[%s278] sm:$0xff]
      %v302 = vld [vmem:[%s278 + $0x8] sm:$0xff]
      %v303 = vld [vmem:[%s278 + $0x10] sm:$0xff]
      %v304 = vld [vmem:[%s278 + $0x18] sm:$0xff]
      %v305 = vld [vmem:[%s278 + $0x20] sm:$0xff]
      %v306 = vld [vmem:[%s278 + $0x28] sm:$0xff]
      %v307 = vld [vmem:[%s278 + $0x30] sm:$0xff]
      %v308 = vld [vmem:[%s278 + $0x38] sm:$0xff]
      %v309 = vld [vmem:[%s278 + $0x40] sm:$0xff]
      %v310 = vld [vmem:[%s278 + $0x48] sm:$0xff]
      %v311 = vld [vmem:[%s278 + $0x50] sm:$0xff]
      %v312 = vld [vmem:[%s278 + $0x58] sm:$0xff]
      %v313 = vld [vmem:[%s278 + $0x60] sm:$0xff]
      %v314 = vld [vmem:[%s278 + $0x68] sm:$0xff]
      %v315 = vld [vmem:[%s278 + $0x70] sm:$0xff]
      %v316 = vld [vmem:[%s278 + $0x78] sm:$0xff]
      %v317 = vld [vmem:[%s278 + $0x80] sm:$0xff]
      %v318 = vld [vmem:[%s278 + $0x88] sm:$0xff]
      %v319 = vld [vmem:[%s278 + $0x90] sm:$0xff]
      %v320 = vld [vmem:[%s278 + $0x98] sm:$0xff]
      %v321 = vld [vmem:[%s278 + $0xa0] sm:$0xff]
      %v322 = vld [vmem:[%s278 + $0xa8] sm:$0xff]
      %v323 = vld [vmem:[%s278 + $0xb0] sm:$0xff]
      %v324 = vld [vmem:[%s278 + $0xb8] sm:$0xff]
      %v325 = vld [vmem:[%s278 + $0xc0] sm:$0xff]
      %v326 = vld [vmem:[%s278 + $0xc8] sm:$0xff]
      %v327 = vld [vmem:[%s278 + $0xd0] sm:$0xff]
      %v328 = vld [vmem:[%s278 + $0xd8] sm:$0xff]
      %v329 = vld [vmem:[%s278 + $0xe0] sm:$0xff]
      %v330 = vld [vmem:[%s278 + $0xe8] sm:$0xff]
      %v331 = vld [vmem:[%s278 + $0xf0] sm:$0xff]
      %v332 = vld [vmem:[%s278 + $0xf8] sm:$0xff]
      %v333 = vld [vmem:[%s283] sm:$0x3]
      %v335 = vlaneseq
      %v336 = vshrl.u32 %v335, 7
      %v337 = vsub.s32 0, %v336
      %v338 = vrot.slane %v333, %v337
      %v339 = vlaneseq
      %v340 = vshrl.u32 %v339, 7
      %v341 = vsub.s32 1, %v340
      %v342 = vrot.slane %v333, %v341
      %345 = vmatprep.subr.mxu0 %v332
      %346 = vmatpush1.msra.mxu0 %v331
      %347 = vmatprep.subr.mxu0 %v330
      %348 = vmatpush1.msra.mxu0 %v329
      %349 = vmatprep.subr.mxu0 %v328
      %350 = vmatpush1.msra.mxu0 %v327
      %351 = vmatprep.subr.mxu0 %v326
      %352 = vmatpush1.msra.mxu0 %v325
      %353 = vmatprep.subr.mxu0 %v324
      %354 = vmatpush1.msra.mxu0 %v323
      %355 = vmatprep.subr.mxu0 %v322
      %356 = vmatpush1.msra.mxu0 %v321
      %357 = vmatprep.subr.mxu0 %v320
      %358 = vmatpush1.msra.mxu0 %v319
      %359 = vmatprep.subr.mxu0 %v318
      %360 = vmatpush1.msra.mxu0 %v317
      %361 = vmatprep.subr.mxu0 %v316
      %362 = vmatpush1.msra.mxu0 %v315
      %363 = vmatprep.subr.mxu0 %v314
      %364 = vmatpush1.msra.mxu0 %v313
      %365 = vmatprep.subr.mxu0 %v312
      %366 = vmatpush1.msra.mxu0 %v311
      %367 = vmatprep.subr.mxu0 %v310
      %368 = vmatpush1.msra.mxu0 %v309
      %369 = vmatprep.subr.mxu0 %v308
      %370 = vmatpush1.msra.mxu0 %v307
      %371 = vmatprep.subr.mxu0 %v306
      %372 = vmatpush1.msra.mxu0 %v305
      %373 = vmatprep.subr.mxu0 %v304
      %374 = vmatpush1.msra.mxu0 %v303
      %375 = vmatprep.subr.mxu0 %v302
      %376 = vmatpush1.msra.mxu0 %v301
      %377 = vmatprep.subr.mxu0 0.0
      %378 = vmatpush2.msra.mxu0 0.0
      %379 = vmatprep.subr.mxu0 0.0
      %380 = vmatpush2.msra.mxu0 0.0
      %381 = vmatprep.subr.mxu0 0.0
      %382 = vmatpush2.msra.mxu0 0.0
      %383 = vmatprep.subr.mxu0 0.0
      %384 = vmatpush2.msra.mxu0 0.0
      %385 = vmatprep.subr.mxu0 0.0
      %386 = vmatpush2.msra.mxu0 0.0
      %387 = vmatprep.subr.mxu0 0.0
      %388 = vmatpush2.msra.mxu0 0.0
      %389 = vmatprep.subr.mxu0 0.0
      %390 = vmatpush2.msra.mxu0 0.0
      %391 = vmatprep.subr.mxu0 0.0
      %392 = vmatpush2.msra.mxu0 0.0
      %393 = vmatprep.subr.mxu0 0.0
      %394 = vmatpush2.msra.mxu0 0.0
      %395 = vmatprep.subr.mxu0 0.0
      %396 = vmatpush2.msra.mxu0 0.0
      %397 = vmatprep.subr.mxu0 0.0
      %398 = vmatpush2.msra.mxu0 0.0
      %399 = vmatprep.subr.mxu0 0.0
      %400 = vmatpush2.msra.mxu0 0.0
      %401 = vmatprep.subr.mxu0 0.0
      %402 = vmatpush2.msra.mxu0 0.0
      %403 = vmatprep.subr.mxu0 0.0
      %404 = vmatpush2.msra.mxu0 0.0
      %405 = vmatprep.subr.mxu0 0.0
      %406 = vmatpush2.msra.mxu0 0.0
      %407 = vmatprep.subr.mxu0 0.0
      %408 = vmatpush2.msra.mxu0 0.0
      %409 = vmatprep.mubr.f32.mxu0 0.0
      %410 = vmatmul.mubr.f32.gmra.mxu0 %v300
      %v411 = vpop.f32.mrf.mxu0
      %v412 = vadd.f32 %v338, %v411
      %v413 = vpop.f32.mrf.mxu0
      %v414 = vadd.f32 %v342, %v413
      %415 = vdwg.mxu0
      %v416 = vxor.u32 %v412, 2147483648
      %v417 = vmul.f32 %v416, 1.442695
      %v418 = vpow.pop %v417
      %v419 = vadd.f32 %v418, 1.0
      %v420 = vrcp.pop %v419
      %v421 = vmul.f32 1.0, %v420
      %v422 = vmul.f32 %v412, %v421
      %v423 = vmul.f32 %v422, %v414
      %v424 = vld [vmem:[#allocation2] sm:$0xff]
      %v425 = vld [vmem:[%s289] sm:$0xff]
      %v426 = vld [vmem:[%s289 + $0x8] sm:$0xff]
      %v427 = vld [vmem:[%s289 + $0x10] sm:$0xff]
      %v428 = vld [vmem:[%s289 + $0x18] sm:$0xff]
      %v429 = vld [vmem:[%s289 + $0x20] sm:$0xff]
      %v430 = vld [vmem:[%s289 + $0x28] sm:$0xff]
      %v431 = vld [vmem:[%s289 + $0x30] sm:$0xff]
      %v432 = vld [vmem:[%s289 + $0x38] sm:$0xff]
      %v433 = vld [vmem:[%s289 + $0x40] sm:$0xff]
      %v434 = vld [vmem:[%s289 + $0x48] sm:$0xff]
      %v435 = vld [vmem:[%s289 + $0x50] sm:$0xff]
      %v436 = vld [vmem:[%s289 + $0x58] sm:$0xff]
      %v437 = vld [vmem:[%s289 + $0x60] sm:$0xff]
      %v438 = vld [vmem:[%s289 + $0x68] sm:$0xff]
      %v439 = vld [vmem:[%s289 + $0x70] sm:$0xff]
      %v440 = vld [vmem:[%s289 + $0x78] sm:$0xff]
      %441 = vmatprep.subr.mxu0 0.0
      %442 = vmatpush1.msra.mxu0 %v440
      %443 = vmatprep.subr.mxu0 0.0
      %444 = vmatpush1.msra.mxu0 %v439
      %445 = vmatprep.subr.mxu0 0.0
      %446 = vmatpush1.msra.mxu0 %v438
      %447 = vmatprep.subr.mxu0 0.0
      %448 = vmatpush1.msra.mxu0 %v437
      %449 = vmatprep.subr.mxu0 0.0
      %450 = vmatpush1.msra.mxu0 %v436
      %451 = vmatprep.subr.mxu0 0.0
      %452 = vmatpush1.msra.mxu0 %v435
      %453 = vmatprep.subr.mxu0 0.0
      %454 = vmatpush1.msra.mxu0 %v434
      %455 = vmatprep.subr.mxu0 0.0
      %456 = vmatpush1.msra.mxu0 %v433
      %457 = vmatprep.subr.mxu0 0.0
      %458 = vmatpush1.msra.mxu0 %v432
      %459 = vmatprep.subr.mxu0 0.0
      %460 = vmatpush1.msra.mxu0 %v431
      %461 = vmatprep.subr.mxu0 0.0
      %462 = vmatpush1.msra.mxu0 %v430
      %463 = vmatprep.subr.mxu0 0.0
      %464 = vmatpush1.msra.mxu0 %v429
      %465 = vmatprep.subr.mxu0 0.0
      %466 = vmatpush1.msra.mxu0 %v428
      %467 = vmatprep.subr.mxu0 0.0
      %468 = vmatpush1.msra.mxu0 %v427
      %469 = vmatprep.subr.mxu0 0.0
      %470 = vmatpush1.msra.mxu0 %v426
      %471 = vmatprep.subr.mxu0 0.0
      %472 = vmatpush1.msra.mxu0 %v425
      %473 = vmatprep.subr.mxu0 0.0
      %474 = vmatpush2.msra.mxu0 0.0
      %475 = vmatprep.subr.mxu0 0.0
      %476 = vmatpush2.msra.mxu0 0.0
      %477 = vmatprep.subr.mxu0 0.0
      %478 = vmatpush2.msra.mxu0 0.0
      %479 = vmatprep.subr.mxu0 0.0
      %480 = vmatpush2.msra.mxu0 0.0
      %481 = vmatprep.subr.mxu0 0.0
      %482 = vmatpush2.msra.mxu0 0.0
      %483 = vmatprep.subr.mxu0 0.0
      %484 = vmatpush2.msra.mxu0 0.0
      %485 = vmatprep.subr.mxu0 0.0
      %486 = vmatpush2.msra.mxu0 0.0
      %487 = vmatprep.subr.mxu0 0.0
      %488 = vmatpush2.msra.mxu0 0.0
      %489 = vmatprep.subr.mxu0 0.0
      %490 = vmatpush2.msra.mxu0 0.0
      %491 = vmatprep.subr.mxu0 0.0
      %492 = vmatpush2.msra.mxu0 0.0
      %493 = vmatprep.subr.mxu0 0.0
      %494 = vmatpush2.msra.mxu0 0.0
      %495 = vmatprep.subr.mxu0 0.0
      %496 = vmatpush2.msra.mxu0 0.0
      %497 = vmatprep.subr.mxu0 0.0
      %498 = vmatpush2.msra.mxu0 0.0
      %499 = vmatprep.subr.mxu0 0.0
      %500 = vmatpush2.msra.mxu0 0.0
      %501 = vmatprep.subr.mxu0 0.0
      %502 = vmatpush2.msra.mxu0 0.0
      %503 = vmatprep.subr.mxu0 0.0
      %504 = vmatpush2.msra.mxu0 0.0
      %505 = vmatprep.mubr.f32.mxu0 0.0
      %506 = vmatmul.mubr.f32.gmra.mxu0 %v423
      %v507 = vpop.f32.mrf.mxu0
      %v508 = vadd.f32 0.0, %v507
      %v509 = vpop.f32.mrf.mxu0
      %510 = vdwg.mxu0
      %v511 = vadd.f32 %v424, %v508
      %512 = vst [vmem:[#allocation2] sm:$0xff] %v511
      // Predicated region
      $region45: #{swiglu_ffn.1} parent=39 // pred_check
        %p513 = pneg %p295
      $region46: #{swiglu_ffn.1} parent=39 // pred_check_branch
        %515 = sbr.rel (%p513) target = $region48
      $region47: #{swiglu_ffn.1} parent=39 // pred_region
        %v516 = vld [vmem:[#allocation2] sm:$0xff]
        %v517 = vld [vmem:[%s4] sm:$0x1]
        %v519 = vlaneseq
        %v520 = vshrl.u32 %v519, 7
        %v521 = vsub.s32 0, %v520
        %v522 = vrot.slane %v517, %v521
        %v524 = vadd.f32 %v516, %v522
        %525 = vst [vmem:[%s294] sm:$0xff] %v524
      $region48: #{swiglu_ffn.1} parent=39 // pred_fallthru
        _
      %p526 = scmp.lt.s32.totalorder %s20, 1
      %s527 = scalar_select %p526, %s20, 1
      %s528 = smul.addr %s527, 8
      %s529 = scalar_lea.vmem %s5, %s528
      // Predicated region
      $region49: #{swiglu_ffn.1} parent=39 // pred_check
        %p530 = pneg %p171
      $region50: #{swiglu_ffn.1} parent=39 // pred_check_branch
        %532 = sbr.rel (%p530) target = $region52
      $region51: #{swiglu_ffn.1} parent=39 // pred_region
        _
      $region52: #{swiglu_ffn.1} parent=39 // pred_fallthru
        _
    $region40: #{swiglu_ffn.1} parent=5 // pred_fallthru
      _
    %p533 = scmp.le.s32.totalorder 2, %s11
    // Predicated region
    $region53: #{swiglu_ffn.1} parent=5 // pred_check
      %p534 = pneg %p533
    $region54: #{swiglu_ffn.1} parent=5 // pred_check_branch
      %536 = sbr.rel (%p534) target = $region56
    $region55: #{swiglu_ffn.1} parent=5 // pred_region
      %s537 = ssub.s32 %s11, 2
      // Predicated region
      $region57: #{swiglu_ffn.1} parent=55 // pred_check
        %p538 = pneg %p177
      $region58: #{swiglu_ffn.1} parent=55 // pred_check_branch
        %540 = sbr.rel (%p538) target = $region60
      $region59: #{swiglu_ffn.1} parent=55 // pred_region
        %p541 = scmp.lt.s32.totalorder %s22, 1
        %s542 = scalar_select %p541, %s22, 1
        %s543 = smul.addr %s542, 8
        %s544 = scalar_lea.vmem %s5, %s543
      $region60: #{swiglu_ffn.1} parent=55 // pred_fallthru
        _
    $region56: #{swiglu_ffn.1} parent=5 // pred_fallthru
      _
  $region6: #{swiglu_ffn.1} parent=0 // loop_footer
    %s15 = sadd.s32 1, %s11
  $region7: #{swiglu_ffn.1} parent=0 // loop_footer_branch
    %10 = sbr.rel target = $region3
  $region8: #{swiglu_ffn.1} parent=0 // loop_exit
    _

</llo_original>
